<compile_context>
chip_gen: v6e
topology: v6e:2x2x1
jax: 0.10.0
libtpu: 0.0.40
codegen_flags: <defaults>
</compile_context>

<pallas_src>
import itertools

import numpy as np
import jax
import jax.numpy as jnp
from jax.experimental import pallas as pl
from jax.experimental.pallas import tpu as pltpu


def _round_up(x, m):
    return ((x + m - 1) // m) * m


# ----------------------------------------------------------------------------
# Pallas kernels
# ----------------------------------------------------------------------------
def _dice_kernel(pred_ref, tgt_ref, dt_ref, out_ref, num_acc, ds_acc):
    """One (TR, TP) x (Mp, TP) tile of the dice score.

    Accumulates the numerator matmul and pred square-sums across the P grid
    axis; combines with the precomputed target square-sums (dt_ref) and
    writes the (TR, Mp) output block only on the last P tile.
    """
    k = pl.program_id(1)

    @pl.when(k == 0)
    def _():
        num_acc[...] = jnp.zeros_like(num_acc)
        ds_acc[...] = jnp.zeros_like(ds_acc)

    s = jax.nn.sigmoid(pred_ref[...].astype(jnp.float32))           # (TR, TP)
    t = tgt_ref[...].astype(jnp.float32)                            # (Mp, TP)
    # bf16 operands on the MXU, f32 accumulation (binary targets are exact).
    num_acc[...] += jax.lax.dot_general(
        s.astype(jnp.bfloat16), t.astype(jnp.bfloat16),
        (((1,), (1,)), ((), ())),
        preferred_element_type=jnp.float32)                         # (TR, Mp)
    ds_acc[...] += jnp.sum(s * s, axis=-1, keepdims=True)           # (TR, 1)

    @pl.when(k == pl.num_programs(1) - 1)
    def _():
        denom = ds_acc[...] + dt_ref[...] + 1e-4                    # (TR, Mp)
        out_ref[...] = (2.0 * num_acc[...]) * pl.reciprocal(denom, approx=True)


def _iou_kernel(src_ref, tgt_ref, out_ref, inter_acc, b_acc, t_acc):
    """One (Kp, TP) tile of the binarized mask IoU; accumulates over P."""
    k = pl.program_id(0)

    @pl.when(k == 0)
    def _():
        inter_acc[...] = jnp.zeros_like(inter_acc)
        b_acc[...] = jnp.zeros_like(b_acc)
        t_acc[...] = jnp.zeros_like(t_acc)

    s = jax.nn.sigmoid(src_ref[...].astype(jnp.float32))
    b = (s >= 0.4).astype(jnp.float32)
    t = (tgt_ref[...].astype(jnp.float32) > 0.5).astype(jnp.float32)
    inter_acc[...] += jnp.sum(b * t, axis=-1, keepdims=True)
    b_acc[...] += jnp.sum(b, axis=-1, keepdims=True)
    t_acc[...] += jnp.sum(t, axis=-1, keepdims=True)

    @pl.when(k == pl.num_programs(0) - 1)
    def _():
        inter = inter_acc[...]
        union = t_acc[...] + b_acc[...] - inter
        iou = inter * pl.reciprocal(union + 1e-6, approx=True)      # (Kp, 1)
        # Lane-dense output slab; column 0 is sliced out by the wrapper.
        out_ref[...] = jnp.broadcast_to(iou, out_ref.shape)


# ----------------------------------------------------------------------------
# Wrappers: padding, tile sizing, pallas_call
# ----------------------------------------------------------------------------
# Keep the double-buffered input stream comfortably inside v7x's 64 MiB VMEM;
# the same tiling is near HBM roofline on v5e/v6e as well.
_INPUT_VMEM_BUDGET = 12 * 1024 * 1024
_VMEM_LIMIT_CAP = 48 * 1024 * 1024
_NEG_FILL = -30.0  # sigmoid(-30) ~ 1e-13: padded pixels contribute ~nothing


def dice_score_pallas(pred_flat, tgt_masks):
    """dice_score(pred_flat (R,P) logits, tgt_masks (M,P) binary) -> (R, M)."""
    R, P = pred_flat.shape
    M = tgt_masks.shape[0]
    Mp = _round_up(max(M, 1), 128)               # lane-dense output columns
    TR = min(_round_up(max(R, 1), 8), 256)
    tp_budget = _INPUT_VMEM_BUDGET // (2 * 4 * (TR + Mp))
    TP = max(128, (tp_budget // 128) * 128)
    TP = min(TP, _round_up(P, 128))
    R_pad = _round_up(R, TR)
    P_pad = _round_up(P, TP)

    pred_p = jnp.pad(pred_flat.astype(jnp.float32),
                     ((0, R_pad - R), (0, P_pad - P)),
                     constant_values=_NEG_FILL)
    tgt_p = jnp.pad(tgt_masks.astype(jnp.float32),
                    ((0, Mp - M), (0, P_pad - P)))
    # Loop-invariant target square-sums: compute once in plain JAX.
    dt = jnp.sum(tgt_p * tgt_p, axis=-1)[None, :]                   # (1, Mp)

    grid = (R_pad // TR, P_pad // TP)
    vmem_needed = (2 * 4 * TP * (TR + Mp)        # double-buffered inputs
                   + 2 * 4 * TR * Mp             # output buffers
                   + 4 * TR * Mp + 4 * TR * 128  # scratch accumulators
                   + 2 * 4 * 8 * Mp)             # dt block
    vmem_limit = int(min(_VMEM_LIMIT_CAP,
                         max(2 * vmem_needed, 16 * 1024 * 1024)))

    out = pl.pallas_call(
        _dice_kernel,
        out_shape=jax.ShapeDtypeStruct((R_pad, Mp), jnp.float32),
        grid_spec=pltpu.PrefetchScalarGridSpec(
            num_scalar_prefetch=0,
            grid=grid,
            in_specs=[
                pl.BlockSpec((TR, TP), lambda i, k: (i, k)),
                pl.BlockSpec((Mp, TP), lambda i, k: (0, k)),
                pl.BlockSpec((1, Mp), lambda i, k: (0, 0)),
            ],
            out_specs=pl.BlockSpec((TR, Mp), lambda i, k: (i, 0)),
            scratch_shapes=[pltpu.VMEM((TR, Mp), jnp.float32),
                            pltpu.VMEM((TR, 1), jnp.float32)],
        ),
        compiler_params=pltpu.CompilerParams(
            dimension_semantics=("parallel", "arbitrary"),
            vmem_limit_bytes=vmem_limit),
    )(pred_p, tgt_p, dt)
    return out[:R, :M]


def mask_iou_pallas(src_masks, tgt_masks):
    """compute_mask_iou(src (K,P) logits, tgt (K,P) masks) -> (K,) ious."""
    K, P = src_masks.shape
    Kp = _round_up(max(K, 1), 8)
    tp_budget = _INPUT_VMEM_BUDGET // (2 * 4 * (2 * Kp))
    TP = max(128, (tp_budget // 128) * 128)
    TP = min(TP, _round_up(P, 128))
    P_pad = _round_up(P, TP)

    src_p = jnp.pad(src_masks.astype(jnp.float32),
                    ((0, Kp - K), (0, P_pad - P)),
                    constant_values=_NEG_FILL)
    tgt_p = jnp.pad(tgt_masks.astype(jnp.float32),
                    ((0, Kp - K), (0, P_pad - P)))

    grid = (P_pad // TP,)
    vmem_needed = (2 * 4 * TP * 2 * Kp + 2 * 4 * Kp * 128 + 3 * 4 * Kp * 128)
    vmem_limit = int(min(_VMEM_LIMIT_CAP,
                         max(2 * vmem_needed, 16 * 1024 * 1024)))

    out = pl.pallas_call(
        _iou_kernel,
        out_shape=jax.ShapeDtypeStruct((Kp, 128), jnp.float32),
        grid_spec=pltpu.PrefetchScalarGridSpec(
            num_scalar_prefetch=0,
            grid=grid,
            in_specs=[pl.BlockSpec((Kp, TP), lambda k: (0, k)),
                      pl.BlockSpec((Kp, TP), lambda k: (0, k))],
            out_specs=pl.BlockSpec((Kp, 128), lambda k: (0, 0)),
            scratch_shapes=[pltpu.VMEM((Kp, 1), jnp.float32),
                            pltpu.VMEM((Kp, 1), jnp.float32),
                            pltpu.VMEM((Kp, 1), jnp.float32)],
        ),
        compiler_params=pltpu.CompilerParams(
            dimension_semantics=("arbitrary",),
            vmem_limit_bytes=vmem_limit),
    )(src_p, tgt_p)
    # Keep the padded-row slice explicit: padded rows binarize to garbage.
    return out[:K, 0]


# ----------------------------------------------------------------------------
# Host-side glue (matcher bookkeeping + assignment)
# ----------------------------------------------------------------------------
def _linear_sum_assignment_max(cmat):
    """Brute-force rectangular assignment (rows >= cols), maximize total."""
    # TODO(synk): replace with a proper Hungarian implementation for large N.
    n_rows, n_cols = cmat.shape
    best_perm, best_val = None, -np.inf
    for perm in itertools.permutations(range(n_rows), n_cols):
        val = sum(cmat[perm[j], j] for j in range(n_cols))
        if val > best_val:
            best_val, best_perm = val, perm
    rows = np.asarray(best_perm, dtype=np.int64)
    cols = np.arange(n_cols, dtype=np.int64)
    order = np.argsort(rows)
    return rows[order], cols[order]


def cal_iou(pred_masks, pred_logits, targets_np):
    """JAX/Pallas port of Cal_IOU.forward (InstMatcher + mask IoU)."""
    B, N, P = pred_masks.shape

    # --- build tgt_ids / tgt_masks (data-dependent unique(), host-side) ---
    tgt_ids, tgt_mask_list, sizes = [], [], []
    for b in range(B):
        tgt = targets_np[b]
        cnt = 0
        for lbl in sorted(np.unique(tgt).tolist()):
            if lbl == 14:
                continue
            tgt_ids.append(lbl)
            tgt_mask_list.append((tgt == lbl).astype(np.float32))
            cnt += 1
        sizes.append(cnt)
    tgt_ids = np.asarray(tgt_ids, dtype=np.int32)
    tgt_masks_np = np.stack(tgt_mask_list, axis=0)                  # (M, P)
    M = tgt_masks_np.shape[0]

    pred_flat = pred_masks.reshape(B * N, P).astype(jnp.float32)
    tgt_masks = jnp.asarray(tgt_masks_np)

    # --- dice score (tiled Pallas kernel) ---
    dice = dice_score_pallas(pred_flat, tgt_masks)                  # (B*N, M)

    # --- matching cost ---
    match_prob = jax.nn.sigmoid(
        pred_logits.reshape(B * N, -1).astype(jnp.float32))[:, tgt_ids]
    C = dice ** 0.8 * match_prob ** 0.2
    C_np = np.asarray(jax.device_get(C)).reshape(B, N, M)

    # --- per-batch assignment (maximize), host-side control logic ---
    src_rows, tgt_rows = [], []
    off = 0
    for b, sz in enumerate(sizes):
        r, c = _linear_sum_assignment_max(C_np[b, :, off:off + sz])
        src_rows.extend((b * N + r).tolist())
        tgt_rows.extend((off + c).tolist())
        off += sz

    # --- device-side gather of matched rows (no HBM->host->HBM round trip) ---
    src_idx = jnp.asarray(src_rows, dtype=jnp.int32)
    tgt_idx = jnp.asarray(tgt_rows, dtype=jnp.int32)
    src_sel = jnp.take(pred_flat, src_idx, axis=0)                  # (K, P)
    tgt_sel = jnp.take(tgt_masks, tgt_idx, axis=0)                  # (K, P)
    K = int(src_idx.shape[0])

    # --- IoU (tiled Pallas kernel) ---
    ious = mask_iou_pallas(src_sel, tgt_sel)                        # (K,)
    miou = jnp.sum(ious) / K
    return miou, dice, ious, (src_sel, tgt_sel)


# ----------------------------------------------------------------------------
# numpy references for sanity checking
# ----------------------------------------------------------------------------
def _np_sigmoid(x):
    return 1.0 / (1.0 + np.exp(-x))


def _np_dice(inputs, targets):
    s = _np_sigmoid(inputs)
    num = 2.0 * s @ targets.T
    den = (s * s).sum(-1)[:, None] + (targets * targets).sum(-1)[None, :]
    return num / (den + 1e-4)


def _np_iou(inputs, targets):
    b = (_np_sigmoid(inputs) >= 0.4).astype(np.float32)
    t = (targets > 0.5).astype(np.float32)
    inter = (b * t).sum(-1)
    union = t.sum(-1) + b.sum(-1) - inter
    return inter / (union + 1e-6)


# ----------------------------------------------------------------------------
if __name__ == "__main__":
    B, N, H, W, NUM_CLASSES = 2, 8, 16, 16, 15
    P = H * W

    key = jax.random.PRNGKey(0)
    k1, k2 = jax.random.split(key)
    pred_masks = jax.random.normal(k1, (B, N, P), dtype=jnp.float32)
    pred_logits = jax.random.normal(k2, (B, N, NUM_CLASSES), dtype=jnp.float32)

    # deterministic label maps; label 14 = ignore/background
    targets = np.full((B, H, W), 14, dtype=np.int32)
    targets[0, 2:8, 2:8] = 0
    targets[0, 9:14, 3:10] = 3
    targets[0, 1:5, 10:15] = 7
    targets[1, 4:12, 4:12] = 1
    targets[1, 0:3, 12:16] = 5
    targets = targets.reshape(B, P)

    miou, dice, ious, (src_sel, tgt_sel) = cal_iou(pred_masks, pred_logits, targets)
    miou = jax.block_until_ready(miou)

    # --- sanity check kernels against numpy references ---
    pm_np = np.asarray(jax.device_get(pred_masks)).reshape(B * N, P)
    tm = []
    for b in range(B):
        for lbl in sorted(np.unique(targets[b]).tolist()):
            if lbl == 14:
                continue
            tm.append((targets[b] == lbl).astype(np.float32))
    tm = np.stack(tm, axis=0)
    # bf16 MXU operands + approx reciprocal => relaxed tolerance vs f32 ref.
    np.testing.assert_allclose(
        np.asarray(jax.device_get(dice)), _np_dice(pm_np, tm),
        rtol=5e-3, atol=5e-3)
    np.testing.assert_allclose(
        np.asarray(jax.device_get(ious)),
        _np_iou(np.asarray(jax.device_get(src_sel)),
                np.asarray(jax.device_get(tgt_sel))),
        rtol=5e-3, atol=5e-3)
    assert np.isfinite(float(miou))

    print("KERNEL_OK")
</pallas_src>

<mosaic_0001>
module attributes {stable_mosaic.version = 11 : i64} {
  func.func @_dice_kernel(%arg0: i32, %arg1: i32, %arg2: memref<16x256xf32, #tpu.memory_space<vmem>>, %arg3: memref<128x256xf32, #tpu.memory_space<vmem>>, %arg4: memref<1x128xf32, #tpu.memory_space<vmem>>, %arg5: memref<16x128xf32, #tpu.memory_space<vmem>>, %arg6: memref<16x128xf32, #tpu.memory_space<vmem>>, %arg7: memref<16x1xf32, #tpu.memory_space<vmem>>) attributes {dimension_semantics = [#tpu.dimension_semantics<parallel>, #tpu.dimension_semantics<arbitrary>], iteration_bounds = array<i64: 1, 1>, scalar_prefetch = 0 : i64, scratch_operands = 2 : i64, tpu.core_type = #tpu.core_type<tc>, window_params = [{transform_indices = @transform_0, window_bounds = array<i64: 16, 256>}, {transform_indices = @transform_1, window_bounds = array<i64: 128, 256>}, {pipeline_mode = #tpu.pipeline_mode<synchronous>, transform_indices = @transform_2, window_bounds = array<i64: 1, 128>}, {transform_indices = @transform_3, window_bounds = array<i64: 16, 128>}]} {
    %c0_i32 = arith.constant 0 : i32
    %0 = arith.cmpi eq, %arg1, %c0_i32 : i32
    %1 = arith.extui %0 : i1 to i32
    %c0_i32_0 = arith.constant 0 : i32
    %2 = arith.cmpi ne, %1, %c0_i32_0 : i32
    scf.if %2 {
      %cst_16 = arith.constant 0.000000e+00 : f32
      %25 = vector.broadcast %cst_16 : f32 to vector<16x128xf32>
      %c0_17 = arith.constant 0 : index
      %c0_18 = arith.constant 0 : index
      %26 = vector.load %arg6[%c0_17, %c0_18] : memref<16x128xf32, #tpu.memory_space<vmem>>, vector<16x128xf32>
      tpu.vector_store %arg6[%c0_17, %c0_18], %25 {strides = array<i32>} : memref<16x128xf32, #tpu.memory_space<vmem>>, vector<16x128xf32>,
      %cst_19 = arith.constant 0.000000e+00 : f32
      %27 = vector.broadcast %cst_19 : f32 to vector<16x1xf32>
      %c0_20 = arith.constant 0 : index
      %c0_21 = arith.constant 0 : index
      %28 = vector.load %arg7[%c0_20, %c0_21] : memref<16x1xf32, #tpu.memory_space<vmem>>, vector<16x1xf32>
      tpu.vector_store %arg7[%c0_20, %c0_21], %27 {strides = array<i32>} : memref<16x1xf32, #tpu.memory_space<vmem>>, vector<16x1xf32>,
    } else {
    }
    %c0 = arith.constant 0 : index
    %c0_1 = arith.constant 0 : index
    %3 = vector.load %arg2[%c0, %c0_1] : memref<16x256xf32, #tpu.memory_space<vmem>>, vector<16x256xf32>
    %4 = arith.negf %3 : vector<16x256xf32>
    %5 = math.exp %4 : vector<16x256xf32>
    %cst = arith.constant 1.000000e+00 : f32
    %6 = vector.broadcast %cst : f32 to vector<16x256xf32>
    %7 = arith.addf %6, %5 : vector<16x256xf32>
    %8 = arith.divf %6, %7 : vector<16x256xf32>
    %c0_2 = arith.constant 0 : index
    %c0_3 = arith.constant 0 : index
    %9 = vector.load %arg3[%c0_2, %c0_3] : memref<128x256xf32, #tpu.memory_space<vmem>>, vector<128x256xf32>
    %c0_4 = arith.constant 0 : index
    %c0_5 = arith.constant 0 : index
    %10 = vector.load %arg6[%c0_4, %c0_5] : memref<16x128xf32, #tpu.memory_space<vmem>>, vector<16x128xf32>
    %11 = arith.truncf %8 : vector<16x256xf32> to vector<16x256xbf16>
    %12 = arith.truncf %9 : vector<128x256xf32> to vector<128x256xbf16>
    %cst_6 = arith.constant dense<0.000000e+00> : vector<16x128xf32>
    %13 = tpu.matmul %11, %12, %cst_6 {dimension_numbers = #tpu.dot_dimension_numbers<[1], [1], [0], [0], [0, 0, 1, 0], [], []>} : vector<16x256xbf16>, vector<128x256xbf16>, vector<16x128xf32> -> vector<16x128xf32>
    %14 = arith.addf %10, %13 : vector<16x128xf32>
    %c0_7 = arith.constant 0 : index
    %c0_8 = arith.constant 0 : index
    %15 = vector.load %arg6[%c0_7, %c0_8] : memref<16x128xf32, #tpu.memory_space<vmem>>, vector<16x128xf32>
    tpu.vector_store %arg6[%c0_7, %c0_8], %14 {strides = array<i32>} : memref<16x128xf32, #tpu.memory_space<vmem>>, vector<16x128xf32>,
    %c0_9 = arith.constant 0 : index
    %c0_10 = arith.constant 0 : index
    %16 = vector.load %arg7[%c0_9, %c0_10] : memref<16x1xf32, #tpu.memory_space<vmem>>, vector<16x1xf32>
    %17 = arith.mulf %8, %8 : vector<16x256xf32>
    %cst_11 = arith.constant dense<0.000000e+00> : vector<16xf32>
    %18 = vector.multi_reduction <add>, %17, %cst_11 [1] : vector<16x256xf32> to vector<16xf32>
    %19 = vector.shape_cast %18 : vector<16xf32> to vector<16x1xf32>
    %20 = arith.addf %16, %19 : vector<16x1xf32>
    %c0_12 = arith.constant 0 : index
    %c0_13 = arith.constant 0 : index
    %21 = vector.load %arg7[%c0_12, %c0_13] : memref<16x1xf32, #tpu.memory_space<vmem>>, vector<16x1xf32>
    tpu.vector_store %arg7[%c0_12, %c0_13], %20 {strides = array<i32>} : memref<16x1xf32, #tpu.memory_space<vmem>>, vector<16x1xf32>,
    %c0_i32_14 = arith.constant 0 : i32
    %22 = arith.cmpi eq, %arg1, %c0_i32_14 : i32
    %23 = arith.extui %22 : i1 to i32
    %c0_i32_15 = arith.constant 0 : i32
    %24 = arith.cmpi ne, %23, %c0_i32_15 : i32
    scf.if %24 {
      %c0_16 = arith.constant 0 : index
      %c0_17 = arith.constant 0 : index
      %25 = vector.load %arg7[%c0_16, %c0_17] : memref<16x1xf32, #tpu.memory_space<vmem>>, vector<16x1xf32>
      %c0_18 = arith.constant 0 : index
      %c0_19 = arith.constant 0 : index
      %26 = vector.load %arg4[%c0_18, %c0_19] : memref<1x128xf32, #tpu.memory_space<vmem>>, vector<1x128xf32>
      %27 = vector.broadcast %25 : vector<16x1xf32> to vector<16x128xf32>
      %28 = vector.broadcast %26 : vector<1x128xf32> to vector<16x128xf32>
      %29 = arith.addf %27, %28 : vector<16x128xf32>
      %cst_20 = arith.constant 9.99999974E-5 : f32
      %30 = vector.broadcast %cst_20 : f32 to vector<16x128xf32>
      %31 = arith.addf %29, %30 : vector<16x128xf32>
      %c0_21 = arith.constant 0 : index
      %c0_22 = arith.constant 0 : index
      %32 = vector.load %arg6[%c0_21, %c0_22] : memref<16x128xf32, #tpu.memory_space<vmem>>, vector<16x128xf32>
      %cst_23 = arith.constant 2.000000e+00 : f32
      %33 = vector.broadcast %cst_23 : f32 to vector<16x128xf32>
      %34 = arith.mulf %33, %32 : vector<16x128xf32>
      %35 = tpu.reciprocal %31 {approx = true} : vector<16x128xf32> -> vector<16x128xf32>
      %36 = arith.mulf %34, %35 : vector<16x128xf32>
      %c0_24 = arith.constant 0 : index
      %c0_25 = arith.constant 0 : index
      %37 = vector.load %arg5[%c0_24, %c0_25] : memref<16x128xf32, #tpu.memory_space<vmem>>, vector<16x128xf32>
      tpu.vector_store %arg5[%c0_24, %c0_25], %36 {strides = array<i32>} : memref<16x128xf32, #tpu.memory_space<vmem>>, vector<16x128xf32>,
    } else {
    }
    return
  }
  func.func @transform_0(%arg0: i32, %arg1: i32) -> (i32, i32) {
    %c0_i32 = arith.constant 0 : i32
    return %arg0, %arg1 : i32, i32
  }
  func.func @transform_1(%arg0: i32, %arg1: i32) -> (i32, i32) {
    %c0_i32 = arith.constant 0 : i32
    %c0_i32_0 = arith.constant 0 : i32
    return %c0_i32, %arg1 : i32, i32
  }
  func.func @transform_2(%arg0: i32, %arg1: i32) -> (i32, i32) {
    %c0_i32 = arith.constant 0 : i32
    %c0_i32_0 = arith.constant 0 : i32
    %c0_i32_1 = arith.constant 0 : i32
    return %c0_i32, %c0_i32_0 : i32, i32
  }
  func.func @transform_3(%arg0: i32, %arg1: i32) -> (i32, i32) {
    %c0_i32 = arith.constant 0 : i32
    %c0_i32_0 = arith.constant 0 : i32
    return %arg0, %c0_i32 : i32, i32
  }
}

</mosaic_0001>

<llo_original>
// kernel: tpu_custom_call.1
$region0: #{tpu_custom_call.1}
  #allocation0 [shape = 'u32[]', space=smem, size = 0x4, offset = 0x4, fixed_abs, tag = 'smem constant byte address 0x4 - core index']
  #allocation1 [shape = 'u32[144,128]{1,0:T(1,128)}', space=vmem, size = 0x12000, scoped, tag = 'internal scratch']
  #allocation2 [shape = 'f32[16,128]{1,0:T(8,128)}', space=vmem, size = 0x2000, scoped, tag = 'scratch operand']
  #allocation3 [shape = 'f32[16,1]{1,0:T(8,128)}', space=vmem, size = 0x2000, scoped, tag = 'scratch operand']
  %s0 = inlined_call_operand.hbm [shape: f32[16,256], index: 0, kind: input, shape index: {}]
  %s1 = inlined_call_operand.hbm [shape: f32[128,256], index: 1, kind: input, shape index: {}]
  %s2 = inlined_call_operand.vmem [shape: f32[1,128], index: 2, kind: input, shape index: {}]
  %s3 = inlined_call_operand.hbm [shape: f32[16,128], index: 3, kind: output, shape index: {}]
  %s4 = sld [smem:[#allocation0]]
  $region38: #{tpu_custom_call.1} parent=0
    _
  %s6 = ssub.s32 1, %s4
  %s7 = scalar_select 0, %s6, %s4
  $region1: #{tpu_custom_call.1} parent=0
    #allocation4 [shape = 'u8[16384]{0}', space=vmem, size = 0x4000, scoped, tag = 'input window, operand 0, single buffered']
    #allocation5 [shape = 's32[1]{0}', space=sflag, size = 0x4, scoped, tag = 'scoped memory for tpu_custom_call.1']
    #allocation6 [shape = 's32[1]{0}', space=sflag, size = 0x4, scoped, tag = 'scoped memory for tpu_custom_call.1']
    #allocation7 [shape = 'u8[131072]{0}', space=vmem, size = 0x20000, scoped, tag = 'input window, operand 1, single buffered']
    #allocation8 [shape = 's32[1]{0}', space=sflag, size = 0x4, scoped, tag = 'scoped memory for tpu_custom_call.1']
    #allocation9 [shape = 'u8[8192]{0}', space=vmem, size = 0x2000, scoped, tag = 'output window, operand 0, single buffered']
    %8 = vsyncpa [#allocation5], 0
    %9 = vsyncpa [#allocation8], 0
    %10 = vsyncpa [#allocation6], 0
    // Predicated region
    $region2: #{tpu_custom_call.1} parent=1 // pred_check
      _
    $region3: #{tpu_custom_call.1} parent=1 // pred_check_branch
      %12 = sbr.rel (0) target = $region5
    $region4: #{tpu_custom_call.1} parent=1 // pred_region
      %s14 = ssub.s32 512, 512
      %15 = vsyncadd [#allocation5], %s14
      %s16 = sshll.u32 [#allocation4], 4
      %s17 = int_to_ptr.vmem [resolvable:$true] %s16
      %22 = dma.hbm_to_vmem [thread:$0]  %s0, 512, %s17, [#allocation5], 256, 256, 16
    $region5: #{tpu_custom_call.1} parent=1 // pred_fallthru
      _
    // Predicated region
    $region6: #{tpu_custom_call.1} parent=1 // pred_check
      _
    $region7: #{tpu_custom_call.1} parent=1 // pred_check_branch
      %24 = sbr.rel (0) target = $region9
    $region8: #{tpu_custom_call.1} parent=1 // pred_region
      %s26 = ssub.s32 4096, 4096
      %27 = vsyncadd [#allocation8], %s26
      %s28 = sshll.u32 [#allocation7], 4
      %s29 = int_to_ptr.vmem [resolvable:$true] %s28
      %34 = dma.hbm_to_vmem [thread:$0]  %s1, 4096, %s29, [#allocation8], 256, 256, 16
    $region9: #{tpu_custom_call.1} parent=1 // pred_fallthru
      _
    // Predicated region
    $region10: #{tpu_custom_call.1} parent=1 // pred_check
      _
    $region11: #{tpu_custom_call.1} parent=1 // pred_check_branch
      %36 = sbr.rel (0) target = $region13
    $region12: #{tpu_custom_call.1} parent=1 // pred_region
      _
    $region13: #{tpu_custom_call.1} parent=1 // pred_fallthru
      _
    // Predicated region
    $region14: #{tpu_custom_call.1} parent=1 // pred_check
      _
    $region15: #{tpu_custom_call.1} parent=1 // pred_check_branch
      %38 = sbr.rel (0) target = $region17
    $region16: #{tpu_custom_call.1} parent=1 // pred_region
      %39 = dma.done [#allocation5], 512
    $region17: #{tpu_custom_call.1} parent=1 // pred_fallthru
      _
    // Predicated region
    $region18: #{tpu_custom_call.1} parent=1 // pred_check
      _
    $region19: #{tpu_custom_call.1} parent=1 // pred_check_branch
      %41 = sbr.rel (0) target = $region21
    $region20: #{tpu_custom_call.1} parent=1 // pred_region
      %42 = dma.done [#allocation8], 4096
    $region21: #{tpu_custom_call.1} parent=1 // pred_fallthru
      _
    %p44 = scmp.eq.s32.totalorder 0, 0
    // Predicated region
    $region22: #{tpu_custom_call.1} parent=1 // pred_check
      %p45 = pneg %p44
    $region23: #{tpu_custom_call.1} parent=1 // pred_check_branch
      %47 = sbr.rel (%p45) target = $region25
    $region24: #{tpu_custom_call.1} parent=1 // pred_region
      %48 = vst [vmem:[#allocation2] sm:$0xff] 0.0
      %49 = vst [vmem:[#allocation2 + $0x8] sm:$0xff] 0.0
      %vm50 = vcmask 7168
      %51 = vst.msk [vmem:[#allocation3] sm:$0xff] %vm50, 0.0
      %52 = vst.msk [vmem:[#allocation3 + $0x8] sm:$0xff] %vm50, 0.0
    $region25: #{tpu_custom_call.1} parent=1 // pred_fallthru
      _
    %v53 = vld [vmem:[#allocation4] sm:$0xff]
    %v54 = vld [vmem:[#allocation4 + $0x8] sm:$0xff]
    %v55 = vld [vmem:[#allocation4 + $0x10] sm:$0xff]
    %v56 = vld [vmem:[#allocation4 + $0x18] sm:$0xff]
    %v57 = vxor.u32 %v53, 2147483648
    %v58 = vxor.u32 %v54, 2147483648
    %v59 = vxor.u32 %v55, 2147483648
    %v60 = vxor.u32 %v56, 2147483648
    %v61 = vmul.f32 %v57, 1.442695
    %v62 = vpow.pop %v61
    %v63 = vmul.f32 %v58, 1.442695
    %v64 = vpow.pop %v63
    %v65 = vmul.f32 %v59, 1.442695
    %v66 = vpow.pop %v65
    %v67 = vmul.f32 %v60, 1.442695
    %v68 = vpow.pop %v67
    %v69 = vadd.f32 %v62, 1.0
    %v70 = vadd.f32 %v64, 1.0
    %v71 = vadd.f32 %v66, 1.0
    %v72 = vadd.f32 %v68, 1.0
    %v73 = vrcp.pop %v69
    %v74 = vmul.f32 1.0, %v73
    %v75 = vrcp.pop %v70
    %v76 = vmul.f32 1.0, %v75
    %v77 = vrcp.pop %v71
    %v78 = vmul.f32 1.0, %v77
    %v79 = vrcp.pop %v72
    %v80 = vmul.f32 1.0, %v79
    %v81 = vld [vmem:[#allocation7] sm:$0xff]
    %v82 = vld [vmem:[#allocation7 + $0x8] sm:$0xff]
    %v83 = vld [vmem:[#allocation7 + $0x10] sm:$0xff]
    %v84 = vld [vmem:[#allocation7 + $0x18] sm:$0xff]
    %v85 = vld [vmem:[#allocation7 + $0x20] sm:$0xff]
    %v86 = vld [vmem:[#allocation7 + $0x28] sm:$0xff]
    %v87 = vld [vmem:[#allocation7 + $0x30] sm:$0xff]
    %v88 = vld [vmem:[#allocation7 + $0x38] sm:$0xff]
    %v89 = vld [vmem:[#allocation7 + $0x40] sm:$0xff]
    %v90 = vld [vmem:[#allocation7 + $0x48] sm:$0xff]
    %v91 = vld [vmem:[#allocation7 + $0x50] sm:$0xff]
    %v92 = vld [vmem:[#allocation7 + $0x58] sm:$0xff]
    %v93 = vld [vmem:[#allocation7 + $0x60] sm:$0xff]
    %v94 = vld [vmem:[#allocation7 + $0x68] sm:$0xff]
    %v95 = vld [vmem:[#allocation7 + $0x70] sm:$0xff]
    %v96 = vld [vmem:[#allocation7 + $0x78] sm:$0xff]
    %v97 = vld [vmem:[#allocation7 + $0x80] sm:$0xff]
    %v98 = vld [vmem:[#allocation7 + $0x88] sm:$0xff]
    %v99 = vld [vmem:[#allocation7 + $0x90] sm:$0xff]
    %v100 = vld [vmem:[#allocation7 + $0x98] sm:$0xff]
    %v101 = vld [vmem:[#allocation7 + $0xa0] sm:$0xff]
    %v102 = vld [vmem:[#allocation7 + $0xa8] sm:$0xff]
    %v103 = vld [vmem:[#allocation7 + $0xb0] sm:$0xff]
    %v104 = vld [vmem:[#allocation7 + $0xb8] sm:$0xff]
    %v105 = vld [vmem:[#allocation7 + $0xc0] sm:$0xff]
    %v106 = vld [vmem:[#allocation7 + $0xc8] sm:$0xff]
    %v107 = vld [vmem:[#allocation7 + $0xd0] sm:$0xff]
    %v108 = vld [vmem:[#allocation7 + $0xd8] sm:$0xff]
    %v109 = vld [vmem:[#allocation7 + $0xe0] sm:$0xff]
    %v110 = vld [vmem:[#allocation7 + $0xe8] sm:$0xff]
    %v111 = vld [vmem:[#allocation7 + $0xf0] sm:$0xff]
    %v112 = vld [vmem:[#allocation7 + $0xf8] sm:$0xff]
    %v113 = vld [vmem:[#allocation2] sm:$0xff]
    %v114 = vld [vmem:[#allocation2 + $0x8] sm:$0xff]
    %v115 = vpack.c.bf16 %v78, %v74
    %v116 = vpack.c.bf16 %v80, %v76
    %v117 = vpack.c.bf16 %v83, %v81
    %v118 = vpack.c.bf16 %v84, %v82
    %v119 = vpack.c.bf16 %v87, %v85
    %v120 = vpack.c.bf16 %v88, %v86
    %v121 = vpack.c.bf16 %v91, %v89
    %v122 = vpack.c.bf16 %v92, %v90
    %v123 = vpack.c.bf16 %v95, %v93
    %v124 = vpack.c.bf16 %v96, %v94
    %v125 = vpack.c.bf16 %v99, %v97
    %v126 = vpack.c.bf16 %v100, %v98
    %v127 = vpack.c.bf16 %v103, %v101
    %v128 = vpack.c.bf16 %v104, %v102
    %v129 = vpack.c.bf16 %v107, %v105
    %v130 = vpack.c.bf16 %v108, %v106
    %v131 = vpack.c.bf16 %v111, %v109
    %v132 = vpack.c.bf16 %v112, %v110
    %133 = vmatprep.subr.bf16.mxu0 %v132
    %134 = vmatpush1.bf16.xpose.msra.mxu0 %v131
    %135 = vmatprep.subr.bf16.mxu0 %v130
    %136 = vmatpush1.bf16.xpose.msra.mxu0 %v129
    %137 = vmatprep.subr.bf16.mxu0 %v128
    %138 = vmatpush1.bf16.xpose.msra.mxu0 %v127
    %139 = vmatprep.subr.bf16.mxu0 %v126
    %140 = vmatpush1.bf16.xpose.msra.mxu0 %v125
    %141 = vmatprep.subr.bf16.mxu0 %v124
    %142 = vmatpush1.bf16.xpose.msra.mxu0 %v123
    %143 = vmatprep.subr.bf16.mxu0 %v122
    %144 = vmatpush1.bf16.xpose.msra.mxu0 %v121
    %145 = vmatprep.subr.bf16.mxu0 %v120
    %146 = vmatpush1.bf16.xpose.msra.mxu0 %v119
    %147 = vmatprep.subr.bf16.mxu0 %v118
    %148 = vmatpush1.bf16.xpose.msra.mxu0 %v117
    %149 = vmatprep.subr.bf16.mxu0 0
    %150 = vmatpush2.bf16.xpose.msra.mxu0 0
    %151 = vmatprep.subr.bf16.mxu0 0
    %152 = vmatpush2.bf16.xpose.msra.mxu0 0
    %153 = vmatprep.subr.bf16.mxu0 0
    %154 = vmatpush2.bf16.xpose.msra.mxu0 0
    %155 = vmatprep.subr.bf16.mxu0 0
    %156 = vmatpush2.bf16.xpose.msra.mxu0 0
    %157 = vmatprep.subr.bf16.mxu0 0
    %158 = vmatpush2.bf16.xpose.msra.mxu0 0
    %159 = vmatprep.subr.bf16.mxu0 0
    %160 = vmatpush2.bf16.xpose.msra.mxu0 0
    %161 = vmatprep.subr.bf16.mxu0 0
    %162 = vmatpush2.bf16.xpose.msra.mxu0 0
    %163 = vmatprep.subr.bf16.mxu0 0
    %164 = vmatpush2.bf16.xpose.msra.mxu0 0
    %165 = vmatprep.mubr.bf16.mxu0 %v116
    %166 = vmatmul.mubr.bf16.gmra.mxu0 %v115
    %v167 = vpop.f32.mrf.mxu0
    %v168 = vadd.f32 0.0, %v167
    %v169 = vpop.f32.mrf.mxu0
    %v170 = vpop.f32.mrf.mxu0
    %v171 = vadd.f32 0.0, %v170
    %v172 = vpop.f32.mrf.mxu0
    %173 = vdwg.mxu0
    %v174 = vadd.f32 %v113, %v168
    %v175 = vadd.f32 %v114, %v171
    %176 = vst [vmem:[#allocation2] sm:$0xff] %v174
    %177 = vst [vmem:[#allocation2 + $0x8] sm:$0xff] %v175
    %v178 = vld [vmem:[#allocation3] sm:$0xff]
    %v179 = vld [vmem:[#allocation3 + $0x8] sm:$0xff]
    %v180 = vmul.f32 %v74, %v74
    %v181 = vmul.f32 %v76, %v76
    %v182 = vmul.f32 %v78, %v78
    %v183 = vmul.f32 %v80, %v80
    %v184 = vadd.f32 %v180, %v181
    %185 = vadd.xlane.f32.xlu0 %v184
    %v186 = vpop.xlane.xlu0 %185
    %v187 = vadd.f32 %v182, %v183
    %188 = vadd.xlane.f32.xlu0 %v187
    %v189 = vpop.xlane.xlu0 %188
    %v190 = vadd.f32 %v178, %v186
    %v191 = vadd.f32 %v179, %v189
    %vm192 = vcmask 7168
    %193 = vst.msk [vmem:[#allocation3] sm:$0xff] %vm192, %v190
    %194 = vst.msk [vmem:[#allocation3 + $0x8] sm:$0xff] %vm192, %v191
    // Predicated region
    $region26: #{tpu_custom_call.1} parent=1 // pred_check
      %p195 = pneg %p44
    $region27: #{tpu_custom_call.1} parent=1 // pred_check_branch
      %197 = sbr.rel (%p195) target = $region29
    $region28: #{tpu_custom_call.1} parent=1 // pred_region
      %v198 = vld [vmem:[#allocation3] sm:$0xff]
      %v199 = vld [vmem:[#allocation3 + $0x8] sm:$0xff]
      %v200 = vld [vmem:[%s2] sm:$0x1]
      %202 = vset.pattern.permute.xlu0 0
      %203 = vperm.xlu0 %202, %v198
      %v204 = vpop.permute.xlu0 %203
      %207 = vset.pattern.permute.xlu0 0
      %208 = vperm.xlu0 %207, %v199
      %v209 = vpop.permute.xlu0 %208
      %v212 = vlaneseq
      %v213 = vshrl.u32 %v212, 7
      %v214 = vsub.s32 0, %v213
      %v215 = vrot.slane %v200, %v214
      %v217 = vadd.f32 %v204, %v215
      %v218 = vadd.f32 %v209, %v215
      %v219 = vadd.f32 %v217, 0.0001
      %v220 = vadd.f32 %v218, 0.0001
      %v221 = vld [vmem:[#allocation2] sm:$0xff]
      %v222 = vld [vmem:[#allocation2 + $0x8] sm:$0xff]
      %v223 = vmul.f32 %v221, 2.0
      %v224 = vmul.f32 %v222, 2.0
      %v225 = vrcp.pop %v219
      %v226 = vrcp.pop %v220
      %v227 = vmul.f32 %v223, %v225
      %v228 = vmul.f32 %v224, %v226
      %229 = vst [vmem:[#allocation9] sm:$0xff] %v227
      %230 = vst [vmem:[#allocation9 + $0x8] sm:$0xff] %v228
    $region29: #{tpu_custom_call.1} parent=1 // pred_fallthru
      _
    // Predicated region
    $region30: #{tpu_custom_call.1} parent=1 // pred_check
      _
    $region31: #{tpu_custom_call.1} parent=1 // pred_check_branch
      %232 = sbr.rel (0) target = $region33
    $region32: #{tpu_custom_call.1} parent=1 // pred_region
      %s234 = ssub.s32 256, 256
      %235 = vsyncadd [#allocation6], %s234
      %s236 = sshll.u32 [#allocation9], 4
      %s237 = int_to_ptr.vmem [resolvable:$true] %s236
      %242 = dma.vmem_to_hbm [thread:$0]  %s237, 256, %s3, [#allocation6], 128, 128, 8
    $region33: #{tpu_custom_call.1} parent=1 // pred_fallthru
      _
    // Predicated region
    $region34: #{tpu_custom_call.1} parent=1 // pred_check
      _
    $region35: #{tpu_custom_call.1} parent=1 // pred_check_branch
      %244 = sbr.rel (0) target = $region37
    $region36: #{tpu_custom_call.1} parent=1 // pred_region
      %245 = dma.done [#allocation6], 256
    $region37: #{tpu_custom_call.1} parent=1 // pred_fallthru
      _
    %246 = vsyncpa [#allocation5], 1
    %247 = vsyncpa [#allocation8], 1
    %248 = vsyncpa [#allocation6], 1

</llo_original>
